<compile_context>
chip_gen: v5e
topology: v5e:2x2
jax: 0.10.0
libtpu: 0.0.40
codegen_flags: <defaults>
</compile_context>

<pallas_src>
import functools

import jax
import jax.numpy as jnp
from jax.experimental import pallas as pl
from jax.experimental.pallas import tpu as pltpu

K = 3  # final_cov_k


def _conv3x3_kernel(x_ref, w_ref, coord_ref, b_ref, o_ref, *, H, W):
    # x_ref    : (1, TC, HW)    VMEM -- one batch element, one channel tile, flat spatial on lanes
    # w_ref    : (1, K*K, TC)   VMEM -- w_ref[0, t, c] = weight[0, c_global, t//3, t%3]
    # coord_ref: (2, HW) int32  VMEM -- row 0: pixel row index h, row 1: pixel column index w
    # b_ref    : (1,)           SMEM -- scalar bias
    # o_ref    : (1, 1, HW) f32 VMEM -- resident (same block) across the channel-tile axis
    c_idx = pl.program_id(1)
    n_c = pl.num_programs(1)
    HW = x_ref.shape[-1]

    @pl.when(c_idx == 0)
    def _():
        o_ref[...] = jnp.zeros_like(o_ref)

    x = x_ref[0]          # (TC, HW)
    w = w_ref[0]          # (K*K, TC)

    # ONE wide MXU dot per channel tile (M = 9): sum_c w[t, c] * x[c, p] -> (K*K, HW) f32.
    y = jnp.dot(w, x, preferred_element_type=jnp.float32)

    hh = coord_ref[0:1, :]        # (1, HW) int32 -- output pixel row
    ww = coord_ref[1:2, :]        # (1, HW) int32 -- output pixel column

    acc = jnp.zeros((1, HW), jnp.float32)
    for t in range(K * K):
        dh, dw = t // K - 1, t % K - 1
        # rolled[p] == y[t, p + dh*W + dw]   (jnp.roll convention: out[i] = in[i - shift])
        shift = (-(dh * W + dw)) % HW
        row = y[t:t + 1, :]                              # (1, HW)
        if shift != 0:
            row = pltpu.roll(row, shift, axis=1)
        # Zero-padding boundary mask (also kills row/column wrap-around). Only the
        # non-trivial compares are emitted; the center tap needs none.
        conds = []
        if dh == -1:
            conds.append(hh >= 1)
        elif dh == 1:
            conds.append(hh <= H - 2)
        if dw == -1:
            conds.append(ww >= 1)
        elif dw == 1:
            conds.append(ww <= W - 2)
        if conds:
            valid = conds[0]
            for extra in conds[1:]:
                valid = valid & extra
            row = jnp.where(valid, row, 0.0)
        acc = acc + row

    o_ref[...] += acc.reshape(1, 1, HW)

    @pl.when(c_idx == n_c - 1)
    def _():
        o_ref[...] += b_ref[0]


def _pick_channel_tile(C, HW, itemsize, per_buffer_budget_bytes):
    """Largest multiple-of-8 divisor of C whose (TC, HW) block fits the budget."""
    divs = [d for d in range(1, C + 1) if C % d == 0]
    cands = [d for d in divs if d % 8 == 0]
    if not cands:
        return C                       # tiny / odd C: take it whole (block dim == full dim)
    fitting = [d for d in cands if d * HW * itemsize <= per_buffer_budget_bytes]
    return max(fitting) if fitting else min(cands)


def depth_predict_layer(x_nchw, weight, bias, *, channel_tile_budget_bytes=8 << 20):
    """x_nchw: (N, C, H, W); weight: (1, C, K, K); bias: (1,).
    Returns (N, 1, H, W) f32, matching nn.Conv2d(C, 1, 3, stride=1, padding=1)."""
    N, C, H, W = x_nchw.shape
    HW = H * W

    # Copy-less layout change only: no transpose / cast / spatial pad of the activation.
    x_flat = x_nchw.reshape(N, C, HW)
    itemsize = jnp.dtype(x_flat.dtype).itemsize

    TC = _pick_channel_tile(C, HW, itemsize, channel_tile_budget_bytes)
    n_c = C // TC

    # Weight (1, C, K, K) -> (n_c, K*K, TC); tiny (9*C elems), done once in the wrapper.
    w_flat = jnp.transpose(weight[0], (1, 2, 0)).reshape(K * K, C)      # [t, c]
    w_tiles = jnp.transpose(w_flat.reshape(K * K, n_c, TC), (1, 0, 2))  # (n_c, K*K, TC)
    w_tiles = w_tiles.astype(x_flat.dtype)
    b = bias.astype(jnp.float32).reshape((1,))

    # Tiny coordinate table used in-kernel to build the zero-padding boundary masks.
    hh = jnp.broadcast_to(jnp.arange(H, dtype=jnp.int32)[:, None], (H, W)).reshape(HW)
    ww = jnp.broadcast_to(jnp.arange(W, dtype=jnp.int32)[None, :], (H, W)).reshape(HW)
    coords = jnp.stack([hh, ww], axis=0)                                # (2, HW) int32

    # Scoped-VMEM limit sized to the actual block budget (double-buffered x dominates).
    est = (2 * TC * HW * itemsize           # x block (double-buffered)
           + 2 * 1 * HW * 4                 # output block
           + 2 * 2 * HW * 4                 # coords block
           + 2 * K * K * TC * itemsize      # weight block
           + 2 * K * K * HW * 4             # in-kernel (K*K, HW) temporary + slack
           + (2 << 20))
    vmem_limit = int(min(max(est, 32 << 20), 56 << 20))

    kernel = functools.partial(_conv3x3_kernel, H=H, W=W)
    out = pl.pallas_call(
        kernel,
        out_shape=jax.ShapeDtypeStruct((N, 1, HW), jnp.float32),
        grid_spec=pltpu.PrefetchScalarGridSpec(
            num_scalar_prefetch=0,
            grid=(N, n_c),
            in_specs=[
                pl.BlockSpec((1, TC, HW), lambda n, c: (n, c, 0)),
                pl.BlockSpec((1, K * K, TC), lambda n, c: (c, 0, 0)),
                pl.BlockSpec((2, HW), lambda n, c: (0, 0)),
                pl.BlockSpec(memory_space=pltpu.SMEM),
            ],
            out_specs=pl.BlockSpec((1, 1, HW), lambda n, c: (n, 0, 0)),
        ),
        compiler_params=pltpu.CompilerParams(
            dimension_semantics=("parallel", "arbitrary"),
            vmem_limit_bytes=vmem_limit,
        ),
    )(x_flat, w_tiles, coords, b)
    return out.reshape(N, 1, H, W)


def _reference_conv(x_nchw, weight, bias):
    # Pure-JAX reference (lax conv) for the correctness check.
    return jax.lax.conv_general_dilated(
        x_nchw.astype(jnp.float32), weight.astype(jnp.float32),
        window_strides=(1, 1), padding="SAME",
        dimension_numbers=("NCHW", "OIHW", "NCHW"),
    ) + bias.astype(jnp.float32).reshape(1, 1, 1, 1)


if __name__ == "__main__":
    # Small shapes consistent with the module (feat_dim = in channels).
    N, C, H, W = 2, 32, 16, 16

    key = jax.random.PRNGKey(0)
    kx, kw, kb = jax.random.split(key, 3)
    x = jax.random.normal(kx, (N, C, H, W), dtype=jnp.float32)
    fan_in = C * K * K
    weight = jax.random.normal(kw, (1, C, K, K), dtype=jnp.float32) / jnp.sqrt(fan_in)
    bias = jax.random.normal(kb, (1,), dtype=jnp.float32) * 0.01

    ref = jax.block_until_ready(_reference_conv(x, weight, bias))

    # Default: single channel tile (TC = C), one reduction step.
    out = jax.block_until_ready(depth_predict_layer(x, weight, bias))
    assert out.shape == (N, 1, H, W)
    assert jnp.allclose(out, ref, atol=1e-4, rtol=1e-4), "mismatch (single channel tile)"

    # Forced small channel tile (TC = 8, 4 reduction steps) to exercise the accumulation path.
    out_tiled = jax.block_until_ready(
        depth_predict_layer(x, weight, bias, channel_tile_budget_bytes=8 * H * W * 4))
    assert jnp.allclose(out_tiled, ref, atol=1e-4, rtol=1e-4), "mismatch (tiled channels)"

    print("KERNEL_OK")
</pallas_src>

<mosaic_0001>
module attributes {stable_mosaic.version = 11 : i64} {
  func.func @_conv3x3_kernel(%arg0: i32, %arg1: i32, %arg2: memref<1x32x256xf32, #tpu.memory_space<vmem>>, %arg3: memref<1x9x32xf32, #tpu.memory_space<vmem>>, %arg4: memref<2x256xi32, #tpu.memory_space<vmem>>, %arg5: memref<1xf32, #tpu.memory_space<smem>>, %arg6: memref<1x1x256xf32, #tpu.memory_space<vmem>>) attributes {dimension_semantics = [#tpu.dimension_semantics<parallel>, #tpu.dimension_semantics<arbitrary>], iteration_bounds = array<i64: 2, 1>, scalar_prefetch = 0 : i64, scratch_operands = 0 : i64, tpu.core_type = #tpu.core_type<tc>, window_params = [{transform_indices = @transform_0, window_bounds = array<i64: 1, 32, 256>}, {transform_indices = @transform_1, window_bounds = array<i64: 1, 9, 32>}, {pipeline_mode = #tpu.pipeline_mode<synchronous>, transform_indices = @transform_2, window_bounds = array<i64: 2, 256>}, {transform_indices = @transform_3, window_bounds = array<i64: 1>}, {transform_indices = @transform_4, window_bounds = array<i64: 1, 1, 256>}]} {
    %c0_i32 = arith.constant 0 : i32
    %0 = arith.cmpi eq, %arg1, %c0_i32 : i32
    %1 = arith.extui %0 : i1 to i32
    %c0_i32_0 = arith.constant 0 : i32
    %2 = arith.cmpi ne, %1, %c0_i32_0 : i32
    scf.if %2 {
      %cst_37 = arith.constant 0.000000e+00 : f32
      %88 = vector.broadcast %cst_37 : f32 to vector<1x1x256xf32>
      %c0_38 = arith.constant 0 : index
      %c0_39 = arith.constant 0 : index
      %c0_40 = arith.constant 0 : index
      %89 = vector.load %arg6[%c0_38, %c0_39, %c0_40] : memref<1x1x256xf32, #tpu.memory_space<vmem>>, vector<1x1x256xf32>
      tpu.vector_store %arg6[%c0_38, %c0_39, %c0_40], %88 {strides = array<i32>} : memref<1x1x256xf32, #tpu.memory_space<vmem>>, vector<1x1x256xf32>,
    } else {
    }
    %c0 = arith.constant 0 : index
    %c0_1 = arith.constant 0 : index
    %c0_2 = arith.constant 0 : index
    %3 = vector.load %arg2[%c0, %c0_1, %c0_2] : memref<1x32x256xf32, #tpu.memory_space<vmem>>, vector<1x32x256xf32>
    %4 = vector.shape_cast %3 : vector<1x32x256xf32> to vector<32x256xf32>
    %c0_3 = arith.constant 0 : index
    %c0_4 = arith.constant 0 : index
    %c0_5 = arith.constant 0 : index
    %5 = vector.load %arg3[%c0_3, %c0_4, %c0_5] : memref<1x9x32xf32, #tpu.memory_space<vmem>>, vector<1x9x32xf32>
    %6 = vector.shape_cast %5 : vector<1x9x32xf32> to vector<9x32xf32>
    %cst = arith.constant dense<0.000000e+00> : vector<9x256xf32>
    %7 = tpu.matmul %6, %4, %cst {dimension_numbers = #tpu.dot_dimension_numbers<[1], [0], [0], [1], [0, 0, 1, 1], [], []>} : vector<9x32xf32>, vector<32x256xf32>, vector<9x256xf32> -> vector<9x256xf32>
    %c0_6 = arith.constant 0 : index
    %c0_7 = arith.constant 0 : index
    %8 = vector.load %arg4[%c0_6, %c0_7] : memref<2x256xi32, #tpu.memory_space<vmem>>, vector<1x256xi32>
    %c1 = arith.constant 1 : index
    %c0_8 = arith.constant 0 : index
    %9 = vector.load %arg4[%c1, %c0_8] : memref<2x256xi32, #tpu.memory_space<vmem>>, vector<1x256xi32>
    %cst_9 = arith.constant 0.000000e+00 : f32
    %10 = vector.broadcast %cst_9 : f32 to vector<1x256xf32>
    %11 = vector.extract_strided_slice %7 {offsets = [0, 0], sizes = [1, 256], strides = [1, 1]} : vector<9x256xf32> to vector<1x256xf32>
    %c17_i32 = arith.constant 17 : i32
    %12 = tpu.dynamic_rotate %11 by %c17_i32 dim 1 : vector<1x256xf32>, i32 -> vector<1x256xf32>
    %c1_i32 = arith.constant 1 : i32
    %13 = vector.broadcast %c1_i32 : i32 to vector<1x256xi32>
    %14 = arith.cmpi sge, %8, %13 : vector<1x256xi32>
    %c1_i32_10 = arith.constant 1 : i32
    %15 = vector.broadcast %c1_i32_10 : i32 to vector<1x256xi32>
    %16 = arith.cmpi sge, %9, %15 : vector<1x256xi32>
    %17 = arith.andi %14, %16 : vector<1x256xi1>
    %cst_11 = arith.constant 0.000000e+00 : f32
    %18 = vector.broadcast %cst_11 : f32 to vector<1x256xf32>
    %19 = arith.select %17, %12, %18 : vector<1x256xi1>, vector<1x256xf32>
    %20 = arith.addf %10, %19 : vector<1x256xf32>
    %21 = vector.extract_strided_slice %7 {offsets = [1, 0], sizes = [1, 256], strides = [1, 1]} : vector<9x256xf32> to vector<1x256xf32>
    %c16_i32 = arith.constant 16 : i32
    %22 = tpu.dynamic_rotate %21 by %c16_i32 dim 1 : vector<1x256xf32>, i32 -> vector<1x256xf32>
    %c1_i32_12 = arith.constant 1 : i32
    %23 = vector.broadcast %c1_i32_12 : i32 to vector<1x256xi32>
    %24 = arith.cmpi sge, %8, %23 : vector<1x256xi32>
    %cst_13 = arith.constant 0.000000e+00 : f32
    %25 = vector.broadcast %cst_13 : f32 to vector<1x256xf32>
    %26 = arith.select %24, %22, %25 : vector<1x256xi1>, vector<1x256xf32>
    %27 = arith.addf %20, %26 : vector<1x256xf32>
    %28 = vector.extract_strided_slice %7 {offsets = [2, 0], sizes = [1, 256], strides = [1, 1]} : vector<9x256xf32> to vector<1x256xf32>
    %c15_i32 = arith.constant 15 : i32
    %29 = tpu.dynamic_rotate %28 by %c15_i32 dim 1 : vector<1x256xf32>, i32 -> vector<1x256xf32>
    %c1_i32_14 = arith.constant 1 : i32
    %30 = vector.broadcast %c1_i32_14 : i32 to vector<1x256xi32>
    %31 = arith.cmpi sge, %8, %30 : vector<1x256xi32>
    %c14_i32 = arith.constant 14 : i32
    %32 = vector.broadcast %c14_i32 : i32 to vector<1x256xi32>
    %33 = arith.cmpi sle, %9, %32 : vector<1x256xi32>
    %34 = arith.andi %31, %33 : vector<1x256xi1>
    %cst_15 = arith.constant 0.000000e+00 : f32
    %35 = vector.broadcast %cst_15 : f32 to vector<1x256xf32>
    %36 = arith.select %34, %29, %35 : vector<1x256xi1>, vector<1x256xf32>
    %37 = arith.addf %27, %36 : vector<1x256xf32>
    %38 = vector.extract_strided_slice %7 {offsets = [3, 0], sizes = [1, 256], strides = [1, 1]} : vector<9x256xf32> to vector<1x256xf32>
    %c1_i32_16 = arith.constant 1 : i32
    %39 = tpu.dynamic_rotate %38 by %c1_i32_16 dim 1 : vector<1x256xf32>, i32 -> vector<1x256xf32>
    %c1_i32_17 = arith.constant 1 : i32
    %40 = vector.broadcast %c1_i32_17 : i32 to vector<1x256xi32>
    %41 = arith.cmpi sge, %9, %40 : vector<1x256xi32>
    %cst_18 = arith.constant 0.000000e+00 : f32
    %42 = vector.broadcast %cst_18 : f32 to vector<1x256xf32>
    %43 = arith.select %41, %39, %42 : vector<1x256xi1>, vector<1x256xf32>
    %44 = arith.addf %37, %43 : vector<1x256xf32>
    %45 = vector.extract_strided_slice %7 {offsets = [4, 0], sizes = [1, 256], strides = [1, 1]} : vector<9x256xf32> to vector<1x256xf32>
    %46 = arith.addf %44, %45 : vector<1x256xf32>
    %47 = vector.extract_strided_slice %7 {offsets = [5, 0], sizes = [1, 256], strides = [1, 1]} : vector<9x256xf32> to vector<1x256xf32>
    %c255_i32 = arith.constant 255 : i32
    %48 = tpu.dynamic_rotate %47 by %c255_i32 dim 1 : vector<1x256xf32>, i32 -> vector<1x256xf32>
    %c14_i32_19 = arith.constant 14 : i32
    %49 = vector.broadcast %c14_i32_19 : i32 to vector<1x256xi32>
    %50 = arith.cmpi sle, %9, %49 : vector<1x256xi32>
    %cst_20 = arith.constant 0.000000e+00 : f32
    %51 = vector.broadcast %cst_20 : f32 to vector<1x256xf32>
    %52 = arith.select %50, %48, %51 : vector<1x256xi1>, vector<1x256xf32>
    %53 = arith.addf %46, %52 : vector<1x256xf32>
    %54 = vector.extract_strided_slice %7 {offsets = [6, 0], sizes = [1, 256], strides = [1, 1]} : vector<9x256xf32> to vector<1x256xf32>
    %c241_i32 = arith.constant 241 : i32
    %55 = tpu.dynamic_rotate %54 by %c241_i32 dim 1 : vector<1x256xf32>, i32 -> vector<1x256xf32>
    %c14_i32_21 = arith.constant 14 : i32
    %56 = vector.broadcast %c14_i32_21 : i32 to vector<1x256xi32>
    %57 = arith.cmpi sle, %8, %56 : vector<1x256xi32>
    %c1_i32_22 = arith.constant 1 : i32
    %58 = vector.broadcast %c1_i32_22 : i32 to vector<1x256xi32>
    %59 = arith.cmpi sge, %9, %58 : vector<1x256xi32>
    %60 = arith.andi %57, %59 : vector<1x256xi1>
    %cst_23 = arith.constant 0.000000e+00 : f32
    %61 = vector.broadcast %cst_23 : f32 to vector<1x256xf32>
    %62 = arith.select %60, %55, %61 : vector<1x256xi1>, vector<1x256xf32>
    %63 = arith.addf %53, %62 : vector<1x256xf32>
    %64 = vector.extract_strided_slice %7 {offsets = [7, 0], sizes = [1, 256], strides = [1, 1]} : vector<9x256xf32> to vector<1x256xf32>
    %c240_i32 = arith.constant 240 : i32
    %65 = tpu.dynamic_rotate %64 by %c240_i32 dim 1 : vector<1x256xf32>, i32 -> vector<1x256xf32>
    %c14_i32_24 = arith.constant 14 : i32
    %66 = vector.broadcast %c14_i32_24 : i32 to vector<1x256xi32>
    %67 = arith.cmpi sle, %8, %66 : vector<1x256xi32>
    %cst_25 = arith.constant 0.000000e+00 : f32
    %68 = vector.broadcast %cst_25 : f32 to vector<1x256xf32>
    %69 = arith.select %67, %65, %68 : vector<1x256xi1>, vector<1x256xf32>
    %70 = arith.addf %63, %69 : vector<1x256xf32>
    %71 = vector.extract_strided_slice %7 {offsets = [8, 0], sizes = [1, 256], strides = [1, 1]} : vector<9x256xf32> to vector<1x256xf32>
    %c239_i32 = arith.constant 239 : i32
    %72 = tpu.dynamic_rotate %71 by %c239_i32 dim 1 : vector<1x256xf32>, i32 -> vector<1x256xf32>
    %c14_i32_26 = arith.constant 14 : i32
    %73 = vector.broadcast %c14_i32_26 : i32 to vector<1x256xi32>
    %74 = arith.cmpi sle, %8, %73 : vector<1x256xi32>
    %c14_i32_27 = arith.constant 14 : i32
    %75 = vector.broadcast %c14_i32_27 : i32 to vector<1x256xi32>
    %76 = arith.cmpi sle, %9, %75 : vector<1x256xi32>
    %77 = arith.andi %74, %76 : vector<1x256xi1>
    %cst_28 = arith.constant 0.000000e+00 : f32
    %78 = vector.broadcast %cst_28 : f32 to vector<1x256xf32>
    %79 = arith.select %77, %72, %78 : vector<1x256xi1>, vector<1x256xf32>
    %80 = arith.addf %70, %79 : vector<1x256xf32>
    %c0_29 = arith.constant 0 : index
    %c0_30 = arith.constant 0 : index
    %c0_31 = arith.constant 0 : index
    %81 = vector.load %arg6[%c0_29, %c0_30, %c0_31] : memref<1x1x256xf32, #tpu.memory_space<vmem>>, vector<1x1x256xf32>
    %82 = vector.shape_cast %80 : vector<1x256xf32> to vector<1x1x256xf32>
    %83 = arith.addf %81, %82 : vector<1x1x256xf32>
    %c0_32 = arith.constant 0 : index
    %c0_33 = arith.constant 0 : index
    %c0_34 = arith.constant 0 : index
    %84 = vector.load %arg6[%c0_32, %c0_33, %c0_34] : memref<1x1x256xf32, #tpu.memory_space<vmem>>, vector<1x1x256xf32>
    tpu.vector_store %arg6[%c0_32, %c0_33, %c0_34], %83 {strides = array<i32>} : memref<1x1x256xf32, #tpu.memory_space<vmem>>, vector<1x1x256xf32>,
    %c0_i32_35 = arith.constant 0 : i32
    %85 = arith.cmpi eq, %arg1, %c0_i32_35 : i32
    %86 = arith.extui %85 : i1 to i32
    %c0_i32_36 = arith.constant 0 : i32
    %87 = arith.cmpi ne, %86, %c0_i32_36 : i32
    scf.if %87 {
      %c0_37 = arith.constant 0 : index
      %c0_38 = arith.constant 0 : index
      %c0_39 = arith.constant 0 : index
      %88 = vector.load %arg6[%c0_37, %c0_38, %c0_39] : memref<1x1x256xf32, #tpu.memory_space<vmem>>, vector<1x1x256xf32>
      %c0_40 = arith.constant 0 : index
      %89 = memref.load %arg5[%c0_40] : memref<1xf32, #tpu.memory_space<smem>>
      %90 = vector.broadcast %89 : f32 to vector<1x1x256xf32>
      %91 = arith.addf %88, %90 : vector<1x1x256xf32>
      %c0_41 = arith.constant 0 : index
      %c0_42 = arith.constant 0 : index
      %c0_43 = arith.constant 0 : index
      %92 = vector.load %arg6[%c0_41, %c0_42, %c0_43] : memref<1x1x256xf32, #tpu.memory_space<vmem>>, vector<1x1x256xf32>
      tpu.vector_store %arg6[%c0_41, %c0_42, %c0_43], %91 {strides = array<i32>} : memref<1x1x256xf32, #tpu.memory_space<vmem>>, vector<1x1x256xf32>,
    } else {
    }
    return
  }
  func.func @transform_0(%arg0: i32, %arg1: i32) -> (i32, i32, i32) {
    %c0_i32 = arith.constant 0 : i32
    %c0_i32_0 = arith.constant 0 : i32
    return %arg0, %arg1, %c0_i32 : i32, i32, i32
  }
  func.func @transform_1(%arg0: i32, %arg1: i32) -> (i32, i32, i32) {
    %c0_i32 = arith.constant 0 : i32
    %c0_i32_0 = arith.constant 0 : i32
    %c0_i32_1 = arith.constant 0 : i32
    return %arg1, %c0_i32, %c0_i32_0 : i32, i32, i32
  }
  func.func @transform_2(%arg0: i32, %arg1: i32) -> (i32, i32) {
    %c0_i32 = arith.constant 0 : i32
    %c0_i32_0 = arith.constant 0 : i32
    %c0_i32_1 = arith.constant 0 : i32
    return %c0_i32, %c0_i32_0 : i32, i32
  }
  func.func @transform_3(%arg0: i32, %arg1: i32) -> i32 {
    %c0_i32 = arith.constant 0 : i32
    %c0_i32_0 = arith.constant 0 : i32
    return %c0_i32 : i32
  }
  func.func @transform_4(%arg0: i32, %arg1: i32) -> (i32, i32, i32) {
    %c0_i32 = arith.constant 0 : i32
    %c0_i32_0 = arith.constant 0 : i32
    %c0_i32_1 = arith.constant 0 : i32
    return %arg0, %c0_i32, %c0_i32_0 : i32, i32, i32
  }
}

</mosaic_0001>

<llo_original>
// kernel: tpu_custom_call.1
$region0: #{tpu_custom_call.1}
  #allocation0 [shape = 'u32[]', space=smem, size = 0x4, offset = 0x4, fixed_abs, tag = 'smem constant byte address 0x4 - core index']
  #allocation1 [shape = 'u32[72,128]{1,0:T(1,128)}', space=vmem, size = 0x9000, scoped, tag = 'internal scratch']
  #allocation2 [shape = 'f32[1]{0:T(128)S(6)}', space=smem, size = 0x200, scoped, tag = 'scoped memory for tpu_custom_call.1']
  %s0 = inlined_call_operand.hbm [shape: f32[2,32,256], index: 0, kind: input, shape index: {}]
  %s1 = inlined_call_operand.vmem [shape: f32[1,9,32], index: 1, kind: input, shape index: {}]
  %s2 = inlined_call_operand.vmem [shape: s32[2,256], index: 2, kind: input, shape index: {}]
  %s3 = inlined_call_operand.<no memory space> [shape: f32[1], index: 3, kind: input, shape index: {}]
  %s4 = inlined_call_operand.hbm [shape: f32[2,1,256], index: 4, kind: output, shape index: {}]
  %s5 = sld [smem:[#allocation0]]
  $region61: #{tpu_custom_call.1} parent=0
    _
  %s7 = ssub.s32 1, %s5
  %s8 = scalar_select 0, %s7, %s5
  %9 = sst [smem:[#allocation2]] %s3
  $region1: #{tpu_custom_call.1} parent=0
    #allocation3 [shape = 'u8[65536]{0}', space=vmem, size = 0x10000, scoped, tag = 'input window, operand 0']
    #allocation4 [shape = 's32[2]{0}', space=sflag, size = 0x8, scoped, tag = 'scoped memory for tpu_custom_call.1']
    #allocation5 [shape = 's32[2]{0}', space=sflag, size = 0x8, scoped, tag = 'scoped memory for tpu_custom_call.1']
    #allocation6 [shape = 'u8[2048]{0}', space=vmem, size = 0x800, scoped, tag = 'output window, operand 0']
    %10 = vsyncpa [#allocation4], 0
    %s11 = scalar_lea.sflag [#allocation4], 1
    %12 = vsyncpa %s11, 0
    %13 = vsyncpa [#allocation5], 0
    %s14 = scalar_lea.sflag [#allocation5], 1
    %15 = vsyncpa %s14, 0
    loop: start=0, step=1, limit=4
    $region2: #{tpu_custom_call.1} parent=1 // loop_pre_header
      _
    $region3: #{tpu_custom_call.1} parent=1 // loop_header
      %s17 = sphi 0, %s21
      %p18 = scmp.ge.s32.totalorder %s17, 4
      %s24 = sphi 0, %s36
      %s25 = sphi 0, %s32
      %s26 = sphi 0, %s24
      %s27 = sphi 0, %s25
      %s28 = sphi 0, %s26
      %s29 = sphi 0, %s27
      %s41 = sphi 0, %s43
      %s44 = sphi 0, %s41
      %s45 = sphi 0, %s44
      %s61 = sphi 0, %s45
      %s67 = sphi 0, %s69
      %s70 = sphi 0, %s67
      %s71 = sphi 0, %s70
      %s87 = sphi 0, %s71
      %s91 = sphi 0, %s91
      %s93 = sphi 0, %s91
      %s94 = sphi 0, %s93
      %s108 = sphi 0, %s94
      %s112 = sphi 0, %s112
      %s114 = sphi 0, %s112
      %s115 = sphi 0, %s114
      %s129 = sphi 0, %s115
      %s135 = sphi 0, %s137
      %s138 = sphi 0, %s135
      %s139 = sphi 0, %s138
      %s155 = sphi 0, %s139
    $region4: #{tpu_custom_call.1} parent=1 // loop_header_branch
      %20 = sbr.rel (%p18) target = $region8
    $region5: #{tpu_custom_call.1} parent=1 // loop_body
      %s22 = ssub.s32 %s17, 1
      %s23 = ssub.s32 %s17, 2
      %s30 = sadd.s32 1, %s25
      %p31 = scmp.ge.s32.totalorder %s30, 1
      %s32 = scalar_select %p31, 0, %s30
      %s33 = sadd.s32 1, %s24
      %s34 = scalar_select %p31, %s33, %s24
      %p35 = scmp.ge.s32.totalorder %s34, 2
      %s36 = scalar_select %p35, 0, %s34
      %s37 = ssub.s32 %s24, %s36
      %s38 = ssub.s32 %s25, %s32
      %s39 = sor.u32 %s37, %s38
      %p40 = scmp.eq.s32.totalorder %s39, 0
      %s42 = sadd.s32 %s41, 1
      %s43 = scalar_select %p40, %s41, %s42
      %p46 = pneg %p40
      %p47 = scmp.eq.s32.totalorder %s17, 1
      %p48 = por %p46, %p47
      %p49 = scmp.ne.s32.totalorder %s41, %s44
      %p50 = scmp.eq.s32.totalorder %s17, 0
      %p51 = por %p49, %p50
      %p52 = scmp.ne.s32.totalorder %s41, %s44
      %p53 = scmp.eq.s32.totalorder %s22, 1
      %p54 = por %p52, %p53
      %p55 = scmp.ne.s32.totalorder %s44, %s45
      %p56 = scmp.eq.s32.totalorder %s22, 0
      %p57 = por %p55, %p56
      %p58 = scmp.ne.s32.totalorder %s44, %s45
      %p59 = scmp.eq.s32.totalorder %s23, 1
      %p60 = por %p58, %p59
      %p62 = scmp.ne.s32.totalorder %s45, %s61
      %p63 = scmp.eq.s32.totalorder %s23, 0
      %p64 = por %p62, %p63
      %s65 = ssub.s32 %s25, %s32
      %p66 = scmp.eq.s32.totalorder %s65, 0
      %s68 = sadd.s32 %s67, 1
      %s69 = scalar_select %p66, %s67, %s68
      %p72 = pneg %p66
      %p73 = scmp.eq.s32.totalorder %s17, 1
      %p74 = por %p72, %p73
      %p75 = scmp.ne.s32.totalorder %s67, %s70
      %p76 = scmp.eq.s32.totalorder %s17, 0
      %p77 = por %p75, %p76
      %p78 = scmp.ne.s32.totalorder %s67, %s70
      %p79 = scmp.eq.s32.totalorder %s22, 1
      %p80 = por %p78, %p79
      %p81 = scmp.ne.s32.totalorder %s70, %s71
      %p82 = scmp.eq.s32.totalorder %s22, 0
      %p83 = por %p81, %p82
      %p84 = scmp.ne.s32.totalorder %s70, %s71
      %p85 = scmp.eq.s32.totalorder %s23, 1
      %p86 = por %p84, %p85
      %p88 = scmp.ne.s32.totalorder %s71, %s87
      %p89 = scmp.eq.s32.totalorder %s23, 0
      %p90 = por %p88, %p89
      %s92 = sadd.s32 %s91, 1
      %p95 = scmp.eq.s32.totalorder %s17, 1
      %p96 = scmp.ne.s32.totalorder %s91, %s93
      %p97 = scmp.eq.s32.totalorder %s17, 0
      %p98 = por %p96, %p97
      %p99 = scmp.ne.s32.totalorder %s91, %s93
      %p100 = scmp.eq.s32.totalorder %s22, 1
      %p101 = por %p99, %p100
      %p102 = scmp.ne.s32.totalorder %s93, %s94
      %p103 = scmp.eq.s32.totalorder %s22, 0
      %p104 = por %p102, %p103
      %p105 = scmp.ne.s32.totalorder %s93, %s94
      %p106 = scmp.eq.s32.totalorder %s23, 1
      %p107 = por %p105, %p106
      %p109 = scmp.ne.s32.totalorder %s94, %s108
      %p110 = scmp.eq.s32.totalorder %s23, 0
      %p111 = por %p109, %p110
      %s113 = sadd.s32 %s112, 1
      %p116 = scmp.eq.s32.totalorder %s17, 1
      %p117 = scmp.ne.s32.totalorder %s112, %s114
      %p118 = scmp.eq.s32.totalorder %s17, 0
      %p119 = por %p117, %p118
      %p120 = scmp.ne.s32.totalorder %s112, %s114
      %p121 = scmp.eq.s32.totalorder %s22, 1
      %p122 = por %p120, %p121
      %p123 = scmp.ne.s32.totalorder %s114, %s115
      %p124 = scmp.eq.s32.totalorder %s22, 0
      %p125 = por %p123, %p124
      %p126 = scmp.ne.s32.totalorder %s114, %s115
      %p127 = scmp.eq.s32.totalorder %s23, 1
      %p128 = por %p126, %p127
      %p130 = scmp.ne.s32.totalorder %s115, %s129
      %p131 = scmp.eq.s32.totalorder %s23, 0
      %p132 = por %p130, %p131
      %s133 = ssub.s32 %s24, %s36
      %p134 = scmp.eq.s32.totalorder %s133, 0
      %s136 = sadd.s32 %s135, 1
      %s137 = scalar_select %p134, %s135, %s136
      %p140 = pneg %p134
      %p141 = scmp.eq.s32.totalorder %s17, 1
      %p142 = por %p140, %p141
      %p143 = scmp.ne.s32.totalorder %s135, %s138
      %p144 = scmp.eq.s32.totalorder %s17, 0
      %p145 = por %p143, %p144
      %p146 = scmp.ne.s32.totalorder %s135, %s138
      %p147 = scmp.eq.s32.totalorder %s22, 1
      %p148 = por %p146, %p147
      %p149 = scmp.ne.s32.totalorder %s138, %s139
      %p150 = scmp.eq.s32.totalorder %s22, 0
      %p151 = por %p149, %p150
      %p152 = scmp.ne.s32.totalorder %s138, %s139
      %p153 = scmp.eq.s32.totalorder %s23, 1
      %p154 = por %p152, %p153
      %p156 = scmp.ne.s32.totalorder %s139, %s155
      %p157 = scmp.eq.s32.totalorder %s23, 0
      %p158 = por %p156, %p157
      %p159 = scmp.le.s32.totalorder 1, %s17
      %p160 = scmp.lt.s32.totalorder %s17, 3
      %p161 = pnand %p159, %p160
      %p162 = pneg %p161
      // Predicated region
      $region9: #{tpu_custom_call.1} parent=5 // pred_check
        _
      $region10: #{tpu_custom_call.1} parent=5 // pred_check_branch
        %164 = sbr.rel (%p161) target = $region12
      $region11: #{tpu_custom_call.1} parent=5 // pred_region
        %s165 = ssub.s32 %s17, 1
        // Predicated region
        $region13: #{tpu_custom_call.1} parent=11 // pred_check
          %p166 = pneg %p83
        $region14: #{tpu_custom_call.1} parent=11 // pred_check_branch
          %168 = sbr.rel (%p166) target = $region16
        $region15: #{tpu_custom_call.1} parent=11 // pred_region
          %p169 = scmp.lt.s32.totalorder %s27, 0
          %s170 = scalar_select %p169, %s27, 0
          %s171 = smul.addr %s170, 2
          %s172 = smul.addr %s171, 8
          %s173 = scalar_lea.vmem %s1, %s172
        $region16: #{tpu_custom_call.1} parent=11 // pred_fallthru
          _
        // Predicated region
        $region17: #{tpu_custom_call.1} parent=11 // pred_check
          %p174 = pneg %p104
        $region18: #{tpu_custom_call.1} parent=11 // pred_check_branch
          %176 = sbr.rel (%p174) target = $region20
        $region19: #{tpu_custom_call.1} parent=11 // pred_region
          _
        $region20: #{tpu_custom_call.1} parent=11 // pred_fallthru
          _
        // Predicated region
        $region21: #{tpu_custom_call.1} parent=11 // pred_check
          %p177 = pneg %p125
        $region22: #{tpu_custom_call.1} parent=11 // pred_check_branch
          %179 = sbr.rel (%p177) target = $region24
        $region23: #{tpu_custom_call.1} parent=11 // pred_region
          _
        $region24: #{tpu_custom_call.1} parent=11 // pred_fallthru
          _
      $region12: #{tpu_custom_call.1} parent=5 // pred_fallthru
        _
      %p180 = scmp.lt.s32.totalorder %s17, 2
      // Predicated region
      $region25: #{tpu_custom_call.1} parent=5 // pred_check
        %p181 = pneg %p180
      $region26: #{tpu_custom_call.1} parent=5 // pred_check_branch
        %183 = sbr.rel (%p181) target = $region28
      $region27: #{tpu_custom_call.1} parent=5 // pred_region
        // Predicated region
        $region29: #{tpu_custom_call.1} parent=27 // pred_check
          %p184 = pneg %p51
        $region30: #{tpu_custom_call.1} parent=27 // pred_check_branch
          %186 = sbr.rel (%p184) target = $region32
        $region31: #{tpu_custom_call.1} parent=27 // pred_region
          %s187 = sand.u32 %s41, 1
          %s188 = scalar_lea.sflag [#allocation4], %s187
          %s189 = sand.u32 %s41, 1
          %s190 = smul.addr %s189, 64
          %s191 = scalar_lea.vmem [#allocation3], %s190
          %s192 = smul.u32 4, %s25
          %194 = vsyncadd %s188, 0
          %s195 = smul.addr %s192, 2
          %s196 = smul.addr %s24, 8
          %s197 = sadd.s32 %s195, %s196
          %s198 = smul.addr %s197, 8
          %s199 = scalar_lea.hbm %s0, %s198
          %s200 = sshll.u32 %s199, 4
          %s201 = int_to_ptr.hbm [resolvable:$true] %s200
          %s202 = sshll.u32 %s191, 4
          %s203 = int_to_ptr.vmem [resolvable:$true] %s202
          %208 = dma.hbm_to_vmem [thread:$0]  %s201, 1024, %s203, %s188, 256, 256, 16
        $region32: #{tpu_custom_call.1} parent=27 // pred_fallthru
          _
      $region28: #{tpu_custom_call.1} parent=5 // pred_fallthru
        _
      %p209 = scmp.le.s32.totalorder 1, %s17
      %p210 = scmp.lt.s32.totalorder %s17, 3
      %p211 = pnand %p209, %p210
      %p212 = pneg %p211
      // Predicated region
      $region33: #{tpu_custom_call.1} parent=5 // pred_check
        _
      $region34: #{tpu_custom_call.1} parent=5 // pred_check_branch
        %214 = sbr.rel (%p211) target = $region36
      $region35: #{tpu_custom_call.1} parent=5 // pred_region
        %s215 = ssub.s32 %s17, 1
        %s216 = sand.u32 %s44, 1
        %s217 = scalar_lea.sflag [#allocation4], %s216
        %s218 = sand.u32 %s44, 1
        %s219 = smul.addr %s218, 64
        %s220 = scalar_lea.vmem [#allocation3], %s219
        // Predicated region
        $region37: #{tpu_custom_call.1} parent=35 // pred_check
          %p221 = pneg %p57
        $region38: #{tpu_custom_call.1} parent=35 // pred_check_branch
          %223 = sbr.rel (%p221) target = $region40
        $region39: #{tpu_custom_call.1} parent=35 // pred_region
          %225 = dma.done %s217, 1024
        $region40: #{tpu_custom_call.1} parent=35 // pred_fallthru
          _
        %s226 = sand.u32 %s44, 1
        %s227 = scalar_lea.sflag [#allocation4], %s226
        %s228 = sand.u32 %s44, 1
        %s229 = smul.addr %s228, 64
        %s230 = scalar_lea.vmem [#allocation3], %s229
        %p231 = pneg %p57
        %p232 = pneg %p54
        %p233 = scmp.lt.s32.totalorder %s27, 0
        %s234 = scalar_select %p233, %s27, 0
        %s235 = smul.addr %s234, 2
        %s236 = smul.addr %s235, 8
        %s237 = scalar_lea.vmem %s1, %s236
        %p238 = pneg %p83
        %p239 = pneg %p80
        %p240 = pneg %p104
        %p241 = pneg %p101
        %p242 = pneg %p125
        %p243 = pneg %p122
        %p244 = pneg %p151
        %p245 = pneg %p148
        %s246 = sand.u32 %s138, 1
        %s247 = scalar_lea.sflag [#allocation5], %s246
        %s248 = sand.u32 %s138, 1
        %s249 = smul.addr %s248, 2
        %s250 = scalar_lea.vmem [#allocation6], %s249
        %s251 = smul.u32 4, %s27
        %p252 = scmp.lt.s32.totalorder %s27, 0
        %s253 = scalar_select %p252, %s27, 0
        %s254 = smul.addr %s253, 2
        %s255 = smul.addr %s254, 8
        %s256 = scalar_lea.vmem %s1, %s255
        %p257 = scmp.eq.s32.totalorder %s27, 0
        // Predicated region
        $region41: #{tpu_custom_call.1} parent=35 // pred_check
          %p258 = pneg %p257
        $region42: #{tpu_custom_call.1} parent=35 // pred_check_branch
          %260 = sbr.rel (%p258) target = $region44
        $region43: #{tpu_custom_call.1} parent=35 // pred_region
          %v261 = vlaneseq
          %vm262 = vcmp.ge.s32.totalorder %v261, 0
          %vm263 = vcmp.lt.s32.totalorder %v261, 256
          %vm264 = vmand %vm262, %vm263
          %265 = vst.msk [vmem:[%s250] sm:$0x3] %vm264, 0.0
        $region44: #{tpu_custom_call.1} parent=35 // pred_fallthru
          _
        %v266 = vld [vmem:[%s220] sm:$0xff]
        %v267 = vld [vmem:[%s220 + $0x8] sm:$0xff]
        %v268 = vld [vmem:[%s220 + $0x10] sm:$0xff]
        %v269 = vld [vmem:[%s220 + $0x18] sm:$0xff]
        %v270 = vld [vmem:[%s220 + $0x20] sm:$0xff]
        %v271 = vld [vmem:[%s220 + $0x28] sm:$0xff]
        %v272 = vld [vmem:[%s220 + $0x30] sm:$0xff]
        %v273 = vld [vmem:[%s220 + $0x38] sm:$0xff]
        %v274 = vld [vmem:[%s256] sm:$0xff]
        %v275 = vld [vmem:[%s256 + $0x8] sm:$0x1]
        %vm276 = vcmask 261120
        %v278 = vsel %vm276, %v274, 0
        %v281 = vsel %vm276, %v275, 0
        %283 = vmatpush.msra.mxu0 0.0
        %284 = vmatpush.msra.mxu0 0.0
        %285 = vmatpush.msra.mxu0 0.0
        %286 = vmatpush.msra.mxu0 0.0
        %287 = vmatpush.msra.mxu0 0.0
        %288 = vmatpush.msra.mxu0 0.0
        %289 = vmatpush.msra.mxu0 0.0
        %290 = vmatpush.msra.mxu0 0.0
        %291 = vmatpush.msra.mxu0 0.0
        %292 = vmatpush.msra.mxu0 0.0
        %293 = vmatpush.msra.mxu0 0.0
        %294 = vmatpush.msra.mxu0 0.0
        %295 = vmatpush.msra.mxu0 %v272
        %296 = vmatpush.msra.mxu0 %v270
        %297 = vmatpush.msra.mxu0 %v268
        %298 = vmatpush.msra.mxu0 %v266
        %299 = vmatmul.f32.gmra.mxu0 %v278
        %v300 = vpop.f32.mrf.mxu0
        %v301 = vadd.f32 0.0, %v300
        %302 = vmatmul.f32.gmra.mxu0 %v281
        %v303 = vpop.f32.mrf.mxu0
        %v304 = vadd.f32 0.0, %v303
        %305 = vdwg.mxu0
        %306 = vmatpush.msra.mxu0 0.0
        %307 = vmatpush.msra.mxu0 0.0
        %308 = vmatpush.msra.mxu0 0.0
        %309 = vmatpush.msra.mxu0 0.0
        %310 = vmatpush.msra.mxu0 0.0
        %311 = vmatpush.msra.mxu0 0.0
        %312 = vmatpush.msra.mxu0 0.0
        %313 = vmatpush.msra.mxu0 0.0
        %314 = vmatpush.msra.mxu0 0.0
        %315 = vmatpush.msra.mxu0 0.0
        %316 = vmatpush.msra.mxu0 0.0
        %317 = vmatpush.msra.mxu0 0.0
        %318 = vmatpush.msra.mxu0 %v273
        %319 = vmatpush.msra.mxu0 %v271
        %320 = vmatpush.msra.mxu0 %v269
        %321 = vmatpush.msra.mxu0 %v267
        %322 = vmatmul.f32.gmra.mxu0 %v278
        %v323 = vpop.f32.mrf.mxu0
        %v324 = vadd.f32 0.0, %v323
        %325 = vmatmul.f32.gmra.mxu0 %v281
        %v326 = vpop.f32.mrf.mxu0
        %v327 = vadd.f32 0.0, %v326
        %328 = vdwg.mxu0
        %v329 = vld [vmem:[%s2] ss:$2 sm:$0x3]
        %s330 = scalar_lea.vmem %s2, 1
        %v331 = vld [vmem:[%s330] ss:$2 sm:$0x3]
        %332 = vrot.lane.b32.xlu0 %v301, 17
        %v333 = vpop.permute.xlu0 %332
        %334 = vrot.lane.b32.xlu0 %v324, 17
        %v335 = vpop.permute.xlu0 %334
        %v336 = vlaneseq
        %v337 = vand.u32 %v336, 127
        %vm338 = vcmp.lt.s32.totalorder %v337, 17
        %v339 = vsel %vm338, %v333, %v335
        %v340 = vsel %vm338, %v335, %v333
        %vm341 = vcmp.ge.s32.totalorder %v329, 1
        %vm342 = vcmp.ge.s32.totalorder %v331, 1
        %vm343 = vmand %vm341, %vm342
        %v346 = vrot.slane %v339, 7
        %vm347 = vcmask 1040384
        %v348 = vsel %vm347, %v340, %v346
        %v350 = vsel %vm343, %v348, 0.0
        %v351 = vadd.f32 %v350, 0.0
        %v354 = vrot.slane %v301, 1
        %v355 = vrot.slane %v324, 1
        %358 = vrot.lane.b32.xlu0 %v354, 16
        %v359 = vpop.permute.xlu0 %358
        %360 = vrot.lane.b32.xlu0 %v355, 16
        %v361 = vpop.permute.xlu0 %360
        %vm362 = vcmp.lt.s32.totalorder %v337, 16
        %v363 = vsel %vm362, %v359, %v361
        %v364 = vsel %vm362, %v361, %v359
        %v367 = vrot.slane %v363, 7
        %v368 = vsel %vm347, %v364, %v367
        %v370 = vsel %vm341, %v368, 0.0
        %v371 = vadd.f32 %v351, %v370
        %v372 = vrot.slane %v301, 2
        %v373 = vrot.slane %v324, 2
        %376 = vrot.lane.b32.xlu0 %v372, 15
        %v377 = vpop.permute.xlu0 %376
        %378 = vrot.lane.b32.xlu0 %v373, 15
        %v379 = vpop.permute.xlu0 %378
        %vm380 = vcmp.lt.s32.totalorder %v337, 15
        %v381 = vsel %vm380, %v377, %v379
        %v382 = vsel %vm380, %v379, %v377
        %vm383 = vcmp.le.s32.totalorder %v331, 14
        %vm384 = vmand %vm341, %vm383
        %v387 = vrot.slane %v381, 7
        %v388 = vsel %vm347, %v382, %v387
        %v390 = vsel %vm384, %v388, 0.0
        %v391 = vadd.f32 %v371, %v390
        %v392 = vrot.slane %v301, 3
        %v393 = vrot.slane %v324, 3
        %396 = vrot.lane.b32.xlu0 %v392, 1
        %v397 = vpop.permute.xlu0 %396
        %398 = vrot.lane.b32.xlu0 %v393, 1
        %v399 = vpop.permute.xlu0 %398
        %vm400 = vcmp.lt.s32.totalorder %v337, 1
        %v401 = vsel %vm400, %v397, %v399
        %v402 = vsel %vm400, %v399, %v397
        %v405 = vrot.slane %v401, 7
        %v406 = vsel %vm347, %v402, %v405
        %v408 = vsel %vm342, %v406, 0.0
        %v409 = vadd.f32 %v391, %v408
        %410 = vst [vmem:[#allocation1] sm:$0xff] %v301
        %411 = vst [vmem:[#allocation1 + $0x9] sm:$0xff] %v324
        %s412 = scalar_lea.vmem [#allocation1], 4
        %v413 = vld [vmem:[%s412] ss:$9 sm:$0xff]
        %v415 = vadd.f32 %v409, %v413
        %v416 = vrot.slane %v301, 5
        %v417 = vrot.slane %v324, 5
        %420 = vrot.lane.b32.xlu0 %v416, 127
        %v421 = vpop.permute.xlu0 %420
        %422 = vrot.lane.b32.xlu0 %v417, 127
        %v423 = vpop.permute.xlu0 %422
        %vm424 = vcmp.lt.s32.totalorder %v337, 127
        %v425 = vsel %vm424, %v421, %v423
        %v426 = vsel %vm424, %v423, %v421
        %v429 = vrot.slane %v426, 7
        %v430 = vsel %vm347, %v425, %v429
        %v432 = vsel %vm383, %v430, 0.0
        %v433 = vadd.f32 %v415, %v432
        %v434 = vrot.slane %v301, 6
        %v435 = vrot.slane %v324, 6
        %438 = vrot.lane.b32.xlu0 %v434, 113
        %v439 = vpop.permute.xlu0 %438
        %440 = vrot.lane.b32.xlu0 %v435, 113
        %v441 = vpop.permute.xlu0 %440
        %vm442 = vcmp.lt.s32.totalorder %v337, 113
        %v443 = vsel %vm442, %v439, %v441
        %v444 = vsel %vm442, %v441, %v439
        %vm445 = vcmp.le.s32.totalorder %v329, 14
        %vm446 = vmand %vm445, %vm342
        %v449 = vrot.slane %v444, 7
        %v450 = vsel %vm347, %v443, %v449
        %v452 = vsel %vm446, %v450, 0.0
        %v453 = vadd.f32 %v433, %v452
        %v454 = vrot.slane %v301, 7
        %v455 = vrot.slane %v324, 7
        %458 = vrot.lane.b32.xlu0 %v454, 112
        %v459 = vpop.permute.xlu0 %458
        %460 = vrot.lane.b32.xlu0 %v455, 112
        %v461 = vpop.permute.xlu0 %460
        %vm462 = vcmp.lt.s32.totalorder %v337, 112
        %v463 = vsel %vm462, %v459, %v461
        %v464 = vsel %vm462, %v461, %v459
        %v467 = vrot.slane %v464, 7
        %v468 = vsel %vm347, %v463, %v467
        %v470 = vsel %vm445, %v468, 0.0
        %v471 = vadd.f32 %v453, %v470
        %472 = vrot.lane.b32.xlu0 %v304, 111
        %v473 = vpop.permute.xlu0 %472
        %474 = vrot.lane.b32.xlu0 %v327, 111
        %v475 = vpop.permute.xlu0 %474
        %vm476 = vcmp.lt.s32.totalorder %v337, 111
        %v477 = vsel %vm476, %v473, %v475
        %v478 = vsel %vm476, %v475, %v473
        %vm479 = vmand %vm445, %vm383
        %v482 = vrot.slane %v478, 7
        %v483 = vsel %vm347, %v477, %v482
        %v485 = vsel %vm479, %v483, 0.0
        %v486 = vadd.f32 %v471, %v485
        %v487 = vld [vmem:[%s250] sm:$0x3]
        %v488 = vadd.f32 %v487, %v486
        %v489 = vlaneseq
        %vm490 = vcmp.ge.s32.totalorder %v489, 0
        %vm491 = vcmp.lt.s32.totalorder %v489, 256
        %vm492 = vmand %vm490, %vm491
        %493 = vst.msk [vmem:[%s250] sm:$0x3] %vm492, %v488
        // Predicated region
        $region45: #{tpu_custom_call.1} parent=35 // pred_check
          %p494 = pneg %p257
        $region46: #{tpu_custom_call.1} parent=35 // pred_check_branch
          %496 = sbr.rel (%p494) target = $region48
        $region47: #{tpu_custom_call.1} parent=35 // pred_region
          %v497 = vld [vmem:[%s250] sm:$0x3]
          %s498 = sld [smem:[#allocation2]]
          %v499 = vstv %s498
          %v500 = vadd.f32 %v497, %v499
          %501 = vst.msk [vmem:[%s250] sm:$0x3] %vm492, %v500
        $region48: #{tpu_custom_call.1} parent=35 // pred_fallthru
          _
        %s502 = sand.u32 %s138, 1
        %s503 = scalar_lea.sflag [#allocation5], %s502
        %s504 = sand.u32 %s138, 1
        %s505 = smul.addr %s504, 2
        %s506 = scalar_lea.vmem [#allocation6], %s505
        // Predicated region
        $region49: #{tpu_custom_call.1} parent=35 // pred_check
          %p507 = pneg %p148
        $region50: #{tpu_custom_call.1} parent=35 // pred_check_branch
          %509 = sbr.rel (%p507) target = $region52
        $region51: #{tpu_custom_call.1} parent=35 // pred_region
          %511 = vsyncadd %s503, 0
          %s512 = smul.addr %s26, 2
          %s513 = scalar_lea.hbm %s4, %s512
          %s515 = sshll.u32 %s506, 4
          %s516 = int_to_ptr.vmem [resolvable:$true] %s515
          %s517 = sshll.u32 %s513, 4
          %s518 = int_to_ptr.hbm [resolvable:$true] %s517
          %520 = dma.vmem_to_hbm [thread:$0]  %s516, 32, %s518, %s503
        $region52: #{tpu_custom_call.1} parent=35 // pred_fallthru
          _
      $region36: #{tpu_custom_call.1} parent=5 // pred_fallthru
        _
      %p521 = scmp.le.s32.totalorder 2, %s17
      // Predicated region
      $region53: #{tpu_custom_call.1} parent=5 // pred_check
        %p522 = pneg %p521
      $region54: #{tpu_custom_call.1} parent=5 // pred_check_branch
        %524 = sbr.rel (%p522) target = $region56
      $region55: #{tpu_custom_call.1} parent=5 // pred_region
        %s525 = ssub.s32 %s17, 2
        // Predicated region
        $region57: #{tpu_custom_call.1} parent=55 // pred_check
          %p526 = pneg %p154
        $region58: #{tpu_custom_call.1} parent=55 // pred_check_branch
          %528 = sbr.rel (%p526) target = $region60
        $region59: #{tpu_custom_call.1} parent=55 // pred_region
          %s529 = sand.u32 %s139, 1
          %s530 = scalar_lea.sflag [#allocation5], %s529
          %s531 = sand.u32 %s139, 1
          %s532 = smul.addr %s531, 2
          %s533 = scalar_lea.vmem [#allocation6], %s532
          %535 = dma.done %s530, 32
        $region60: #{tpu_custom_call.1} parent=55 // pred_fallthru
          _
      $region56: #{tpu_custom_call.1} parent=5 // pred_fallthru
        _
    $region6: #{tpu_custom_call.1} parent=1 // loop_footer
      %s21 = sadd.s32 1, %s17
    $region7: #{tpu_custom_call.1} parent=1 // loop_footer_branch
      %16 = sbr.rel target = $region3
    $region8: #{tpu_custom_call.1} parent=1 // loop_exit
      _
    %536 = vsyncpa [#allocation4], 1
    %s537 = scalar_lea.sflag [#allocation4], 1
    %538 = vsyncpa %s537, 1
    %539 = vsyncpa [#allocation5], 1
    %s540 = scalar_lea.sflag [#allocation5], 1
    %541 = vsyncpa %s540, 1

</llo_original>
